<compile_context>
chip_gen: v5e
topology: v5e:2x2
jax: 0.10.0
libtpu: 0.0.40
codegen_flags: <defaults>
</compile_context>

<pallas_src>
import jax
import jax.numpy as jnp
import numpy as np
from jax.experimental import pallas as pl
from jax.experimental.pallas import tpu as pltpu


# ------------------------------ tiling helpers ------------------------------ #

_TB_MAX = 8                 # batch tile (output sublane dim)
_TS_MAX = 512               # seq (reduction) tile upper bound


def _vmem_limit_bytes():
    """Scoped VMEM limit: ~3/4 of physical, capped at 96 MiB (v5e/v6e have 128 MiB, v7x 64 MiB)."""
    cap = 64 * 1024 * 1024
    try:
        info = pltpu.get_tpu_info()
        cap = int(getattr(info, "vmem_capacity_bytes", cap))
    except Exception:
        pass
    return int(max(min(cap * 3 // 4, 96 * 1024 * 1024), 32 * 1024 * 1024))


def _largest_aligned_divisor(dim, align, cap):
    """Largest multiple of `align` that divides `dim` and is <= cap, or None."""
    if cap < align:
        return None
    t = (min(cap, dim) // align) * align
    while t >= align:
        if dim % t == 0:
            return t
        t -= align
    return None


def _tile_plan(B, S, H, n_hidden, vmem_limit):
    """Pick (tb, ts, th) so that NO input padding is ever needed.

    Budgets are expressed in f32 elements (compute/accumulation happens in f32), which keeps
    the in-kernel f32 temporaries bounded even for bf16 inputs.
    """
    per_buf_bytes = min(vmem_limit // (6 * n_hidden), 16 * 1024 * 1024)
    elem_budget = max(per_buf_bytes // 4, 8 * 128)

    # batch tile: multiple of 8 (output / inv sublane dim) or the full batch (no padding)
    tb = _TB_MAX if B % _TB_MAX == 0 else B

    # sequence (reduction) tile: multiple of 8 (sublane dim of mask & hidden blocks) or full S
    th_floor = H if H < 128 else 128
    ts_cap = max((elem_budget // (tb * th_floor)) // 8 * 8, 8)
    ts_max = min(_TS_MAX, ts_cap)
    ts = S if S <= ts_max else (_largest_aligned_divisor(S, 8, ts_max) or S)

    # hidden tile: multiple of 128 (lane dim) dividing H, sized to the VMEM budget; else full H
    th_cap = max(elem_budget // (tb * ts), 1)
    th = _largest_aligned_divisor(H, 128, min(th_cap, H)) or H

    # v7x megacore: keep >= 2 blocks on the 'parallel' (B, H) grid axes when possible
    if (B // tb) * (H // th) < 2 and th > 128:
        smaller = _largest_aligned_divisor(H, 128, th // 2)
        if smaller is not None:
            th = smaller

    return tb, ts, th


# ------------------------------ Pallas kernels ------------------------------ #

def _masked_avg_kernel(mask_ref, inv_ref, h_ref, o_ref, acc_ref):
    """acc += sum_s(h * mask); out = acc * inv_den at the last S step."""
    k = pl.program_id(2)

    @pl.when(k == 0)
    def _init():
        acc_ref[...] = jnp.zeros_like(acc_ref)

    m = mask_ref[...].astype(jnp.float32)            # (tb, ts, 1)
    h = h_ref[...].astype(jnp.float32)               # (tb, ts, th) - f32 math (v5e: no bf16 VALU)
    acc_ref[...] += jnp.sum(h * m, axis=1)

    @pl.when(k == pl.num_programs(2) - 1)
    def _finalize():
        o_ref[...] = (acc_ref[...] * inv_ref[...]).astype(o_ref.dtype)


def _masked_avg2_kernel(mask_ref, inv_ref, h1_ref, h2_ref, o_ref, acc_ref):
    """acc += sum_s((h1 + h2) * mask); the 0.5 is folded into inv_den (computed outside)."""
    k = pl.program_id(2)

    @pl.when(k == 0)
    def _init():
        acc_ref[...] = jnp.zeros_like(acc_ref)

    m = mask_ref[...].astype(jnp.float32)            # (tb, ts, 1)
    h = h1_ref[...].astype(jnp.float32) + h2_ref[...].astype(jnp.float32)   # f32 add (matches ref)
    acc_ref[...] += jnp.sum(h * m, axis=1)

    @pl.when(k == pl.num_programs(2) - 1)
    def _finalize():
        o_ref[...] = (acc_ref[...] * inv_ref[...]).astype(o_ref.dtype)


# ------------------------------ pallas_call wrapper ------------------------------ #

def _masked_avg_pallas(attention_mask, hiddens):
    """hiddens: tuple of 1 or 2 (B, S, H) arrays. Returns the masked mean, shape (B, H)."""
    n_hidden = len(hiddens)
    B, S, H = hiddens[0].shape
    out_dtype = hiddens[0].dtype

    vmem_limit = _vmem_limit_bytes()
    tb, ts, th = _tile_plan(B, S, H, n_hidden, vmem_limit)

    # Denominator (incl. the 1/n_hidden averaging factor) computed once in XLA from the tiny
    # (B, S) mask; its reciprocal is passed as a (B, 1) f32 input (no per-step mask reduce).
    inv_den = 1.0 / (attention_mask.astype(jnp.float32).sum(-1, keepdims=True) * float(n_hidden))

    # Mask as (B, S, 1): seq becomes a sublane dim (8-alignment), lane dim is full-extent 1.
    mask3 = attention_mask[:, :, None]

    grid = (B // tb, H // th, S // ts)                       # S (reduction) innermost

    mask_spec = pl.BlockSpec((tb, ts, 1), lambda i, j, k: (i, k, 0))
    inv_spec = pl.BlockSpec((tb, 1), lambda i, j, k: (i, 0))
    h_spec = pl.BlockSpec((tb, ts, th), lambda i, j, k: (i, k, j))
    out_spec = pl.BlockSpec((tb, th), lambda i, j, k: (i, j))    # resident across k

    kernel = _masked_avg_kernel if n_hidden == 1 else _masked_avg2_kernel

    return pl.pallas_call(
        kernel,
        out_shape=jax.ShapeDtypeStruct((B, H), out_dtype),
        grid_spec=pltpu.PrefetchScalarGridSpec(
            num_scalar_prefetch=0,
            grid=grid,
            in_specs=[mask_spec, inv_spec] + [h_spec] * n_hidden,
            out_specs=out_spec,
            scratch_shapes=[
                pltpu.VMEM((tb, th), jnp.float32),           # numerator accumulator
            ],
        ),
        compiler_params=pltpu.CompilerParams(
            dimension_semantics=("parallel", "parallel", "arbitrary"),
            vmem_limit_bytes=vmem_limit,
        ),
    )(mask3, inv_den, *hiddens)


def pooler_forward(pooler_type, attention_mask, last_hidden, hidden_states=None):
    """JAX/Pallas equivalent of Pooler.forward.

    attention_mask: (B, S) float; last_hidden: (B, S, H); hidden_states: list of (B, S, H).
    Returns (B, H).
    """
    assert pooler_type in ['cls', 'cls_before_pooler', 'avg', 'avg_top2',
                           'avg_first_last'], 'unrecognized pooling type %s' % pooler_type

    if pooler_type in ('cls', 'cls_before_pooler'):
        # TODO(synk): [:, 0] is a pure strided HBM slice; it is left to XLA rather than a
        # Pallas kernel that would DMA the full (B, S, H) tensor (S-fold waste).
        return last_hidden[:, 0]

    if pooler_type == 'avg':
        return _masked_avg_pallas(attention_mask, (last_hidden,))
    if pooler_type == 'avg_first_last':
        return _masked_avg_pallas(attention_mask, (hidden_states[0], hidden_states[-1]))
    # 'avg_top2'
    return _masked_avg_pallas(attention_mask, (hidden_states[-1], hidden_states[-2]))


# --------------- Pure-JAX reference (mirrors the PyTorch code exactly) --------------- #

def pooler_reference(pooler_type, attention_mask, last_hidden, hidden_states=None):
    if pooler_type in ('cls', 'cls_before_pooler'):
        return last_hidden[:, 0]
    if pooler_type == 'avg':
        return (last_hidden * attention_mask[..., None]).sum(1) / attention_mask.sum(-1)[..., None]
    if pooler_type == 'avg_first_last':
        h = (hidden_states[0] + hidden_states[-1]) / 2.0
        return (h * attention_mask[..., None]).sum(1) / attention_mask.sum(-1)[..., None]
    if pooler_type == 'avg_top2':
        h = (hidden_states[-1] + hidden_states[-2]) / 2.0
        return (h * attention_mask[..., None]).sum(1) / attention_mask.sum(-1)[..., None]
    raise NotImplementedError


# ------------------------------------ self-test ------------------------------------ #

def _make_inputs(key, B, S, H, L, dtype):
    k_hs, _ = jax.random.split(key)
    hs_stack = jax.random.normal(k_hs, (L, B, S, H), dtype=jnp.float32).astype(dtype)
    hidden_states = [hs_stack[i] for i in range(L)]
    last_hidden = hidden_states[-1]
    lengths = 1 + (jnp.arange(B) * 3) % S          # at least 1 valid token per row
    attention_mask = (jnp.arange(S)[None, :] < lengths[:, None]).astype(jnp.float32)
    return attention_mask, last_hidden, hidden_states


if __name__ == "__main__":
    key = jax.random.PRNGKey(0)
    all_types = ['cls', 'cls_before_pooler', 'avg', 'avg_first_last', 'avg_top2']

    # 1) Small f32 test (B=2, S=8, H=32, L=4) -- single-block grid, full-extent tiles.
    am, lh, hs = _make_inputs(key, B=2, S=8, H=32, L=4, dtype=jnp.float32)
    for ptype in all_types:
        out = jax.block_until_ready(pooler_forward(ptype, am, lh, hs))
        ref = pooler_reference(ptype, am, lh, hs)
        assert out.shape == ref.shape
        np.testing.assert_allclose(np.asarray(out), np.asarray(ref), rtol=1e-5, atol=1e-5)

    # 2) Small bf16 test -- f32 in-kernel math + f32 accumulation.
    am, lh, hs = _make_inputs(jax.random.PRNGKey(1), B=2, S=8, H=32, L=4, dtype=jnp.bfloat16)
    hs_f32 = [h.astype(jnp.float32) for h in hs]
    for ptype in ['avg', 'avg_first_last', 'avg_top2']:
        out = jax.block_until_ready(pooler_forward(ptype, am, lh, hs))
        ref = pooler_reference(ptype, am, hs_f32[-1], hs_f32)
        np.testing.assert_allclose(np.asarray(out).astype(np.float32), np.asarray(ref),
                                   rtol=5e-2, atol=5e-2)

    # 3) Tiled f32 test (B=10 -> full-extent batch block, S=640, H=256 -> split for megacore).
    am, lh, hs = _make_inputs(jax.random.PRNGKey(2), B=10, S=640, H=256, L=3, dtype=jnp.float32)
    for ptype in ['avg', 'avg_top2']:
        out = jax.block_until_ready(pooler_forward(ptype, am, lh, hs))
        ref = pooler_reference(ptype, am, lh, hs)
        assert out.shape == ref.shape
        np.testing.assert_allclose(np.asarray(out), np.asarray(ref), rtol=1e-4, atol=1e-5)

    # 4) Ragged shapes with no 128-divisible seq tile (S=600 -> 8-aligned ts, no padding).
    am, lh, hs = _make_inputs(jax.random.PRNGKey(3), B=6, S=600, H=384, L=2, dtype=jnp.float32)
    for ptype in ['avg', 'avg_first_last']:
        out = jax.block_until_ready(pooler_forward(ptype, am, lh, hs))
        ref = pooler_reference(ptype, am, lh, hs)
        assert out.shape == ref.shape
        np.testing.assert_allclose(np.asarray(out), np.asarray(ref), rtol=1e-4, atol=1e-5)

    print("KERNEL_OK")
</pallas_src>

<mosaic_0001>
module attributes {stable_mosaic.version = 11 : i64} {
  func.func @_masked_avg_kernel(%arg0: i32, %arg1: i32, %arg2: i32, %arg3: memref<2x8x1xf32, #tpu.memory_space<vmem>>, %arg4: memref<2x1xf32, #tpu.memory_space<vmem>>, %arg5: memref<2x8x32xf32, #tpu.memory_space<vmem>>, %arg6: memref<2x32xf32, #tpu.memory_space<vmem>>, %arg7: memref<2x32xf32, #tpu.memory_space<vmem>>) attributes {dimension_semantics = [#tpu.dimension_semantics<parallel>, #tpu.dimension_semantics<parallel>, #tpu.dimension_semantics<arbitrary>], iteration_bounds = array<i64: 1, 1, 1>, scalar_prefetch = 0 : i64, scratch_operands = 1 : i64, tpu.core_type = #tpu.core_type<tc>, window_params = [{transform_indices = @transform_0, window_bounds = array<i64: 2, 8, 1>}, {transform_indices = @transform_1, window_bounds = array<i64: 2, 1>}, {transform_indices = @transform_2, window_bounds = array<i64: 2, 8, 32>}, {transform_indices = @transform_3, window_bounds = array<i64: 2, 32>}]} {
    %c0_i32 = arith.constant 0 : i32
    %0 = arith.cmpi eq, %arg2, %c0_i32 : i32
    %1 = arith.extui %0 : i1 to i32
    %c0_i32_0 = arith.constant 0 : i32
    %2 = arith.cmpi ne, %1, %c0_i32_0 : i32
    scf.if %2 {
      %cst_12 = arith.constant 0.000000e+00 : f32
      %14 = vector.broadcast %cst_12 : f32 to vector<2x32xf32>
      %c0_13 = arith.constant 0 : index
      %c0_14 = arith.constant 0 : index
      %15 = vector.load %arg7[%c0_13, %c0_14] : memref<2x32xf32, #tpu.memory_space<vmem>>, vector<2x32xf32>
      tpu.vector_store %arg7[%c0_13, %c0_14], %14 {strides = array<i32>} : memref<2x32xf32, #tpu.memory_space<vmem>>, vector<2x32xf32>,
    } else {
    }
    %c0 = arith.constant 0 : index
    %c0_1 = arith.constant 0 : index
    %c0_2 = arith.constant 0 : index
    %3 = vector.load %arg3[%c0, %c0_1, %c0_2] : memref<2x8x1xf32, #tpu.memory_space<vmem>>, vector<2x8x1xf32>
    %c0_3 = arith.constant 0 : index
    %c0_4 = arith.constant 0 : index
    %c0_5 = arith.constant 0 : index
    %4 = vector.load %arg5[%c0_3, %c0_4, %c0_5] : memref<2x8x32xf32, #tpu.memory_space<vmem>>, vector<2x8x32xf32>
    %c0_6 = arith.constant 0 : index
    %c0_7 = arith.constant 0 : index
    %5 = vector.load %arg7[%c0_6, %c0_7] : memref<2x32xf32, #tpu.memory_space<vmem>>, vector<2x32xf32>
    %6 = vector.broadcast %3 : vector<2x8x1xf32> to vector<2x8x32xf32>
    %7 = arith.mulf %4, %6 : vector<2x8x32xf32>
    %cst = arith.constant dense<0.000000e+00> : vector<2x32xf32>
    %8 = vector.multi_reduction <add>, %7, %cst [1] : vector<2x8x32xf32> to vector<2x32xf32>
    %9 = arith.addf %5, %8 : vector<2x32xf32>
    %c0_8 = arith.constant 0 : index
    %c0_9 = arith.constant 0 : index
    %10 = vector.load %arg7[%c0_8, %c0_9] : memref<2x32xf32, #tpu.memory_space<vmem>>, vector<2x32xf32>
    tpu.vector_store %arg7[%c0_8, %c0_9], %9 {strides = array<i32>} : memref<2x32xf32, #tpu.memory_space<vmem>>, vector<2x32xf32>,
    %c0_i32_10 = arith.constant 0 : i32
    %11 = arith.cmpi eq, %arg2, %c0_i32_10 : i32
    %12 = arith.extui %11 : i1 to i32
    %c0_i32_11 = arith.constant 0 : i32
    %13 = arith.cmpi ne, %12, %c0_i32_11 : i32
    scf.if %13 {
      %c0_12 = arith.constant 0 : index
      %c0_13 = arith.constant 0 : index
      %14 = vector.load %arg7[%c0_12, %c0_13] : memref<2x32xf32, #tpu.memory_space<vmem>>, vector<2x32xf32>
      %c0_14 = arith.constant 0 : index
      %c0_15 = arith.constant 0 : index
      %15 = vector.load %arg4[%c0_14, %c0_15] : memref<2x1xf32, #tpu.memory_space<vmem>>, vector<2x1xf32>
      %16 = vector.broadcast %15 : vector<2x1xf32> to vector<2x32xf32>
      %17 = arith.mulf %14, %16 : vector<2x32xf32>
      %c0_16 = arith.constant 0 : index
      %c0_17 = arith.constant 0 : index
      %18 = vector.load %arg6[%c0_16, %c0_17] : memref<2x32xf32, #tpu.memory_space<vmem>>, vector<2x32xf32>
      tpu.vector_store %arg6[%c0_16, %c0_17], %17 {strides = array<i32>} : memref<2x32xf32, #tpu.memory_space<vmem>>, vector<2x32xf32>,
    } else {
    }
    return
  }
  func.func @transform_0(%arg0: i32, %arg1: i32, %arg2: i32) -> (i32, i32, i32) {
    %c0_i32 = arith.constant 0 : i32
    %c0_i32_0 = arith.constant 0 : i32
    return %arg0, %arg2, %c0_i32 : i32, i32, i32
  }
  func.func @transform_1(%arg0: i32, %arg1: i32, %arg2: i32) -> (i32, i32) {
    %c0_i32 = arith.constant 0 : i32
    %c0_i32_0 = arith.constant 0 : i32
    return %arg0, %c0_i32 : i32, i32
  }
  func.func @transform_2(%arg0: i32, %arg1: i32, %arg2: i32) -> (i32, i32, i32) {
    %c0_i32 = arith.constant 0 : i32
    return %arg0, %arg2, %arg1 : i32, i32, i32
  }
  func.func @transform_3(%arg0: i32, %arg1: i32, %arg2: i32) -> (i32, i32) {
    %c0_i32 = arith.constant 0 : i32
    return %arg0, %arg1 : i32, i32
  }
}

</mosaic_0001>

<llo_original>
// kernel: tpu_custom_call.1
$region0: #{tpu_custom_call.1}
  #allocation0 [shape = 'u32[]', space=smem, size = 0x4, offset = 0x4, fixed_abs, tag = 'smem constant byte address 0x4 - core index']
  #allocation1 [shape = 'u32[72,128]{1,0:T(1,128)}', space=vmem, size = 0x9000, scoped, tag = 'internal scratch']
  #allocation2 [shape = 'f32[2,32]{1,0:T(2,128)}', space=vmem, size = 0x400, scoped, tag = 'scratch operand']
  %s0 = inlined_call_operand.vmem [shape: f32[2,8,1], index: 0, kind: input, shape index: {}]
  %s1 = inlined_call_operand.vmem [shape: f32[2,1], index: 1, kind: input, shape index: {}]
  %s2 = inlined_call_operand.vmem [shape: f32[2,8,32], index: 2, kind: input, shape index: {}]
  %s3 = inlined_call_operand.hbm [shape: f32[2,32], index: 3, kind: output, shape index: {}]
  %s4 = sld [smem:[#allocation0]]
  $region30: #{tpu_custom_call.1} parent=0
    _
  %s6 = ssub.s32 1, %s4
  %s7 = scalar_select 0, %s6, %s4
  $region1: #{tpu_custom_call.1} parent=0
    #allocation3 [shape = 'u8[1024]{0}', space=vmem, size = 0x400, scoped, tag = 'output window, operand 0, single buffered']
    #allocation4 [shape = 's32[1]{0}', space=sflag, size = 0x4, scoped, tag = 'scoped memory for tpu_custom_call.1']
    %8 = vsyncpa [#allocation4], 0
    // Predicated region
    $region2: #{tpu_custom_call.1} parent=1 // pred_check
      _
    $region3: #{tpu_custom_call.1} parent=1 // pred_check_branch
      %10 = sbr.rel (0) target = $region5
    $region4: #{tpu_custom_call.1} parent=1 // pred_region
      _
    $region5: #{tpu_custom_call.1} parent=1 // pred_fallthru
      _
    // Predicated region
    $region6: #{tpu_custom_call.1} parent=1 // pred_check
      _
    $region7: #{tpu_custom_call.1} parent=1 // pred_check_branch
      %12 = sbr.rel (0) target = $region9
    $region8: #{tpu_custom_call.1} parent=1 // pred_region
      _
    $region9: #{tpu_custom_call.1} parent=1 // pred_fallthru
      _
    // Predicated region
    $region10: #{tpu_custom_call.1} parent=1 // pred_check
      _
    $region11: #{tpu_custom_call.1} parent=1 // pred_check_branch
      %14 = sbr.rel (0) target = $region13
    $region12: #{tpu_custom_call.1} parent=1 // pred_region
      _
    $region13: #{tpu_custom_call.1} parent=1 // pred_fallthru
      _
    %p15 = scmp.eq.s32.totalorder 0, 0
    // Predicated region
    $region14: #{tpu_custom_call.1} parent=1 // pred_check
      %p16 = pneg %p15
    $region15: #{tpu_custom_call.1} parent=1 // pred_check_branch
      %18 = sbr.rel (%p16) target = $region17
    $region16: #{tpu_custom_call.1} parent=1 // pred_region
      %vm19 = vcmask 254976
      %20 = vst.msk [vmem:[#allocation2] sm:$0x3] %vm19, 0.0
    $region17: #{tpu_custom_call.1} parent=1 // pred_fallthru
      _
    %v21 = vld [vmem:[%s0] sm:$0xff]
    %v22 = vld [vmem:[%s0 + $0x8] sm:$0xff]
    %v23 = vld [vmem:[%s2] sm:$0xff]
    %v24 = vld [vmem:[%s2 + $0x8] sm:$0xff]
    %v25 = vld [vmem:[#allocation2] sm:$0x3]
    %27 = vset.pattern.permute.xlu0 0
    %28 = vperm.xlu0 %27, %v21
    %v29 = vpop.permute.xlu0 %28
    %32 = vset.pattern.permute.xlu0 0
    %33 = vperm.xlu0 %32, %v22
    %v34 = vpop.permute.xlu0 %33
    %v36 = vmul.f32 %v23, %v29
    %v37 = vmul.f32 %v24, %v34
    %vm38 = vcmask 261120
    %v39 = vsel %vm38, %v36, 0.0
    %v40 = vrot.slane %v39, 4
    %v41 = vadd.f32 %v39, %v40
    %v42 = vrot.slane %v41, 2
    %v43 = vadd.f32 %v41, %v42
    %v44 = vrot.slane %v43, 1
    %v45 = vadd.f32 %v43, %v44
    %v46 = vsel %vm38, %v37, 0.0
    %v47 = vrot.slane %v46, 4
    %v48 = vadd.f32 %v46, %v47
    %v49 = vrot.slane %v48, 2
    %v50 = vadd.f32 %v48, %v49
    %v51 = vrot.slane %v50, 1
    %v52 = vadd.f32 %v50, %v51
    %vm55 = vcmask 1041409
    %v56 = vsel %vm55, %v52, %v45
    %v58 = vadd.f32 %v25, %v56
    %vm59 = vcmask 254976
    %60 = vst.msk [vmem:[#allocation2] sm:$0x3] %vm59, %v58
    // Predicated region
    $region18: #{tpu_custom_call.1} parent=1 // pred_check
      %p61 = pneg %p15
    $region19: #{tpu_custom_call.1} parent=1 // pred_check_branch
      %63 = sbr.rel (%p61) target = $region21
    $region20: #{tpu_custom_call.1} parent=1 // pred_region
      %v64 = vld [vmem:[#allocation2] sm:$0x3]
      %v65 = vld [vmem:[%s1] sm:$0x3]
      %67 = vset.pattern.permute.xlu0 0
      %68 = vperm.xlu0 %67, %v65
      %v69 = vpop.permute.xlu0 %68
      %v71 = vmul.f32 %v64, %v69
      %72 = vst.msk [vmem:[#allocation3] sm:$0x3] %vm59, %v71
    $region21: #{tpu_custom_call.1} parent=1 // pred_fallthru
      _
    // Predicated region
    $region22: #{tpu_custom_call.1} parent=1 // pred_check
      _
    $region23: #{tpu_custom_call.1} parent=1 // pred_check_branch
      %74 = sbr.rel (0) target = $region25
    $region24: #{tpu_custom_call.1} parent=1 // pred_region
      %76 = vsyncadd [#allocation4], 0
      %s78 = sshll.u32 [#allocation3], 4
      %s79 = int_to_ptr.vmem [resolvable:$true] %s78
      %s80 = sshll.u32 %s3, 4
      %s81 = int_to_ptr.hbm [resolvable:$true] %s80
      %83 = dma.vmem_to_hbm [thread:$0]  %s79, 32, %s81, [#allocation4]
    $region25: #{tpu_custom_call.1} parent=1 // pred_fallthru
      _
    // Predicated region
    $region26: #{tpu_custom_call.1} parent=1 // pred_check
      _
    $region27: #{tpu_custom_call.1} parent=1 // pred_check_branch
      %85 = sbr.rel (0) target = $region29
    $region28: #{tpu_custom_call.1} parent=1 // pred_region
      %87 = dma.done [#allocation4], 32
    $region29: #{tpu_custom_call.1} parent=1 // pred_fallthru
      _
    %88 = vsyncpa [#allocation4], 1

</llo_original>
